<compile_context>
chip_gen: v7x
topology: tpu7x:2x2x1
jax: 0.10.0
libtpu: 0.0.40
codegen_flags: <defaults>
</compile_context>

<pallas_src>
import jax
import jax.numpy as jnp
from jax.experimental import pallas as pl
from jax.experimental.pallas import tpu as pltpu

LN_EPS = 1e-5       # PyTorch nn.LayerNorm default
HEAD = 312          # alpha / beta output width
HEAD2 = 2 * HEAD    # 624 (fused heads)
HEAD2_PAD = 640     # padded to 5 * 128 lanes for unmasked stores


def _round_up(x, m):
    return (x + m - 1) // m * m


def _inverse_linear(x):
    # InverseLinear(x) = 1/(1 - x + |x|) + x + |x|
    ax = jnp.abs(x)
    return 1.0 / (1.0 - x + ax) + x + ax


def _layernorm(x, gamma, beta):
    # Single-pass variance: E[x^2] - mu^2 (guarded against tiny negatives).
    mu = jnp.mean(x, axis=-1, keepdims=True)
    var = jnp.maximum(jnp.mean(x * x, axis=-1, keepdims=True) - mu * mu, 0.0)
    return (x - mu) * jax.lax.rsqrt(var + LN_EPS) * gamma + beta


def decoder_kernel(z_ref,
                   w1_ref, b1_ref, g1_ref, be1_ref,
                   w2_ref, b2_ref, g2_ref, be2_ref,
                   wab_ref, bab_ref,
                   out_ref):
    z = z_ref[...].astype(jnp.float32)

    # Linear(2, 64): K=2 contraction on the VPU (broadcast FMAs), MXU stays free.
    h = (z[:, 0:1] * w1_ref[0:1, :]
         + z[:, 1:2] * w1_ref[1:2, :]
         + b1_ref[...])
    h = _layernorm(h, g1_ref[...], be1_ref[...])
    h = jnp.maximum(h, 0.0)

    # Linear(64, 128) -> LayerNorm(128) -> ReLU  (MXU)
    h = jnp.dot(h, w2_ref[...], preferred_element_type=jnp.float32) + b2_ref[...]
    h = _layernorm(h, g2_ref[...], be2_ref[...])
    h = jnp.maximum(h, 0.0)

    # Fused alpha|beta head: one [128, 640] matmul, one epilogue, one
    # lane-dense [TB, 640] store. Columns 624..639 are zero-padded weights.
    ab = jnp.dot(h, wab_ref[...], preferred_element_type=jnp.float32) + bab_ref[...]
    out_ref[...] = _inverse_linear(ab).astype(out_ref.dtype)


def decoder_forward(z, params, *, tb=None):
    """z: [B, 2] float32 -> (a, b) each [B, 312] float32."""
    B = z.shape[0]

    # Batch tile: multiple of 8 sublanes; modest default so double-buffered
    # [TB, 640] f32 output blocks stay well inside v7x / v5e scoped VMEM.
    if tb is None:
        tb = 512 if B >= 512 else _round_up(B, 8)
    tb = max(8, _round_up(min(tb, _round_up(B, 8)), 8))
    b_pad = _round_up(B, tb)
    if b_pad != B:
        z = jnp.pad(z, ((0, b_pad - B), (0, 0)))
    grid = (b_pad // tb,)

    # Fuse + lane-pad the two heads: wab [128, 640], bab [1, 640].
    wab = jnp.concatenate([params["wa"], params["wb"]], axis=1)
    wab = jnp.pad(wab, ((0, 0), (0, HEAD2_PAD - HEAD2)))
    bab = jnp.concatenate([params["ba"], params["bb"]], axis=1)
    bab = jnp.pad(bab, ((0, 0), (0, HEAD2_PAD - HEAD2)))

    weights = (
        params["w1"], params["b1"], params["g1"], params["be1"],
        params["w2"], params["b2"], params["g2"], params["be2"],
        wab, bab,
    )

    def rep_spec(shape):  # replicated (weights / biases / LN params)
        return pl.BlockSpec(shape, lambda i: (0, 0))

    in_specs = ([pl.BlockSpec((tb, 2), lambda i: (i, 0))]
                + [rep_spec(w.shape) for w in weights])
    out_spec = pl.BlockSpec((tb, HEAD2_PAD), lambda i: (i, 0))

    n_param = sum(int(w.size) for w in weights)
    cost = pl.CostEstimate(
        flops=2 * b_pad * (2 * 64 + 64 * 128 + 128 * HEAD2),
        transcendentals=0,
        bytes_accessed=4 * (b_pad * 2 + b_pad * HEAD2_PAD + n_param),
    )

    out = pl.pallas_call(
        decoder_kernel,
        out_shape=jax.ShapeDtypeStruct((b_pad, HEAD2_PAD), jnp.float32),
        grid=grid,
        in_specs=in_specs,
        out_specs=out_spec,
        compiler_params=pltpu.CompilerParams(
            dimension_semantics=("parallel",)),
        cost_estimate=cost,
    )(z, *weights)

    a = out[:B, :HEAD]
    b = out[:B, HEAD:HEAD2]
    return a, b


def init_params(key):
    """Deterministic synthetic parameters matching the PyTorch module shapes.

    PyTorch shapes: Linear(2,64), LN(64), Linear(64,128), LN(128),
                    alpha=Linear(128,312), beta=Linear(128,312).
    Weights stored transposed ([in, out]) so the kernel computes x @ W.
    (The module's unused `ref` parameter does not affect forward.)
    """
    ks = jax.random.split(key, 8)

    def w(k, fan_in, fan_out):
        scale = 1.0 / jnp.sqrt(jnp.float32(fan_in))
        return (jax.random.uniform(k, (fan_in, fan_out), jnp.float32,
                                   minval=-1.0, maxval=1.0) * scale)

    return {
        "w1": w(ks[0], 2, 64),
        "b1": jax.random.uniform(ks[1], (1, 64), jnp.float32, -0.5, 0.5),
        "g1": jnp.ones((1, 64), jnp.float32),
        "be1": jnp.zeros((1, 64), jnp.float32),
        "w2": w(ks[2], 64, 128),
        "b2": jax.random.uniform(ks[3], (1, 128), jnp.float32, -0.1, 0.1),
        "g2": jnp.ones((1, 128), jnp.float32),
        "be2": jnp.zeros((1, 128), jnp.float32),
        "wa": w(ks[4], 128, HEAD),
        "ba": jax.random.uniform(ks[5], (1, HEAD), jnp.float32, -0.1, 0.1),
        "wb": w(ks[6], 128, HEAD),
        "bb": jax.random.uniform(ks[7], (1, HEAD), jnp.float32, -0.1, 0.1),
    }


def decoder_reference(z, p):
    """Pure-JAX reference for correctness check."""
    def ln(x, g, b):
        mu = jnp.mean(x, axis=-1, keepdims=True)
        var = jnp.mean((x - mu) ** 2, axis=-1, keepdims=True)
        return (x - mu) / jnp.sqrt(var + LN_EPS) * g + b

    def inv_lin(x):
        return 1.0 / (1.0 - x + jnp.abs(x)) + x + jnp.abs(x)

    h = jnp.maximum(ln(z @ p["w1"] + p["b1"], p["g1"], p["be1"]), 0.0)
    h = jnp.maximum(ln(h @ p["w2"] + p["b2"], p["g2"], p["be2"]), 0.0)
    return inv_lin(h @ p["wa"] + p["ba"]), inv_lin(h @ p["wb"] + p["bb"])


if __name__ == "__main__":
    key = jax.random.PRNGKey(0)
    k_z, k_z2, k_p = jax.random.split(key, 3)
    params = init_params(k_p)

    # Small test matching the module interface (batch=2, latent=2).
    B = 2
    z = jax.random.normal(k_z, (B, 2), jnp.float32)
    a, b = decoder_forward(z, params)
    jax.block_until_ready((a, b))
    a_ref, b_ref = decoder_reference(z, params)
    assert a.shape == (B, HEAD) and b.shape == (B, HEAD)
    assert jnp.allclose(a, a_ref, rtol=1e-4, atol=1e-4)
    assert jnp.allclose(b, b_ref, rtol=1e-4, atol=1e-4)

    # Second check exercising the batch grid (padding + multiple grid steps).
    B2 = 30
    z2 = jax.random.normal(k_z2, (B2, 2), jnp.float32)
    a2, b2 = decoder_forward(z2, params, tb=8)   # 30 -> pad 32, grid=(4,)
    jax.block_until_ready((a2, b2))
    a2_ref, b2_ref = decoder_reference(z2, params)
    assert a2.shape == (B2, HEAD) and b2.shape == (B2, HEAD)
    assert jnp.allclose(a2, a2_ref, rtol=1e-4, atol=1e-4)
    assert jnp.allclose(b2, b2_ref, rtol=1e-4, atol=1e-4)

    print("KERNEL_OK")
</pallas_src>

<mosaic_0001>
module attributes {stable_mosaic.version = 11 : i64} {
  func.func @decoder_kernel(%arg0: i32, %arg1: memref<8x2xf32, #tpu.memory_space<vmem>>, %arg2: memref<2x64xf32, #tpu.memory_space<vmem>>, %arg3: memref<1x64xf32, #tpu.memory_space<vmem>>, %arg4: memref<1x64xf32, #tpu.memory_space<vmem>>, %arg5: memref<1x64xf32, #tpu.memory_space<vmem>>, %arg6: memref<64x128xf32, #tpu.memory_space<vmem>>, %arg7: memref<1x128xf32, #tpu.memory_space<vmem>>, %arg8: memref<1x128xf32, #tpu.memory_space<vmem>>, %arg9: memref<1x128xf32, #tpu.memory_space<vmem>>, %arg10: memref<128x640xf32, #tpu.memory_space<vmem>>, %arg11: memref<1x640xf32, #tpu.memory_space<vmem>>, %arg12: memref<8x640xf32, #tpu.memory_space<vmem>>) attributes {dimension_semantics = [#tpu.dimension_semantics<parallel>], iteration_bounds = array<i64: 1>, scalar_prefetch = 0 : i64, scratch_operands = 0 : i64, tpu.core_type = #tpu.core_type<tc>, window_params = [{transform_indices = @transform_0, window_bounds = array<i64: 8, 2>}, {pipeline_mode = #tpu.pipeline_mode<synchronous>, transform_indices = @transform_1, window_bounds = array<i64: 2, 64>}, {pipeline_mode = #tpu.pipeline_mode<synchronous>, transform_indices = @transform_2, window_bounds = array<i64: 1, 64>}, {pipeline_mode = #tpu.pipeline_mode<synchronous>, transform_indices = @transform_3, window_bounds = array<i64: 1, 64>}, {pipeline_mode = #tpu.pipeline_mode<synchronous>, transform_indices = @transform_4, window_bounds = array<i64: 1, 64>}, {pipeline_mode = #tpu.pipeline_mode<synchronous>, transform_indices = @transform_5, window_bounds = array<i64: 64, 128>}, {pipeline_mode = #tpu.pipeline_mode<synchronous>, transform_indices = @transform_6, window_bounds = array<i64: 1, 128>}, {pipeline_mode = #tpu.pipeline_mode<synchronous>, transform_indices = @transform_7, window_bounds = array<i64: 1, 128>}, {pipeline_mode = #tpu.pipeline_mode<synchronous>, transform_indices = @transform_8, window_bounds = array<i64: 1, 128>}, {pipeline_mode = #tpu.pipeline_mode<synchronous>, transform_indices = @transform_9, window_bounds = array<i64: 128, 640>}, {pipeline_mode = #tpu.pipeline_mode<synchronous>, transform_indices = @transform_10, window_bounds = array<i64: 1, 640>}, {transform_indices = @transform_11, window_bounds = array<i64: 8, 640>}]} {
    %c0 = arith.constant 0 : index
    %c0_0 = arith.constant 0 : index
    %0 = vector.load %arg1[%c0, %c0_0] : memref<8x2xf32, #tpu.memory_space<vmem>>, vector<8x2xf32>
    %1 = vector.extract_strided_slice %0 {offsets = [0, 0], sizes = [8, 1], strides = [1, 1]} : vector<8x2xf32> to vector<8x1xf32>
    %c0_1 = arith.constant 0 : index
    %c0_2 = arith.constant 0 : index
    %2 = vector.load %arg2[%c0_1, %c0_2] : memref<2x64xf32, #tpu.memory_space<vmem>>, vector<1x64xf32>
    %3 = vector.broadcast %1 : vector<8x1xf32> to vector<8x64xf32>
    %4 = vector.broadcast %2 : vector<1x64xf32> to vector<8x64xf32>
    %5 = arith.mulf %3, %4 : vector<8x64xf32>
    %6 = vector.extract_strided_slice %0 {offsets = [0, 1], sizes = [8, 1], strides = [1, 1]} : vector<8x2xf32> to vector<8x1xf32>
    %c1 = arith.constant 1 : index
    %c0_3 = arith.constant 0 : index
    %7 = vector.load %arg2[%c1, %c0_3] : memref<2x64xf32, #tpu.memory_space<vmem>>, vector<1x64xf32>
    %8 = vector.broadcast %6 : vector<8x1xf32> to vector<8x64xf32>
    %9 = vector.broadcast %7 : vector<1x64xf32> to vector<8x64xf32>
    %10 = arith.mulf %8, %9 : vector<8x64xf32>
    %11 = arith.addf %5, %10 : vector<8x64xf32>
    %c0_4 = arith.constant 0 : index
    %c0_5 = arith.constant 0 : index
    %12 = vector.load %arg3[%c0_4, %c0_5] : memref<1x64xf32, #tpu.memory_space<vmem>>, vector<1x64xf32>
    %13 = vector.broadcast %12 : vector<1x64xf32> to vector<8x64xf32>
    %14 = arith.addf %11, %13 : vector<8x64xf32>
    %c0_6 = arith.constant 0 : index
    %c0_7 = arith.constant 0 : index
    %15 = vector.load %arg4[%c0_6, %c0_7] : memref<1x64xf32, #tpu.memory_space<vmem>>, vector<1x64xf32>
    %c0_8 = arith.constant 0 : index
    %c0_9 = arith.constant 0 : index
    %16 = vector.load %arg5[%c0_8, %c0_9] : memref<1x64xf32, #tpu.memory_space<vmem>>, vector<1x64xf32>
    %cst = arith.constant dense<0.000000e+00> : vector<8xf32>
    %17 = vector.multi_reduction <add>, %14, %cst [1] : vector<8x64xf32> to vector<8xf32>
    %18 = vector.shape_cast %17 : vector<8xf32> to vector<8x1xf32>
    %cst_10 = arith.constant 6.400000e+01 : f32
    %19 = vector.broadcast %cst_10 : f32 to vector<8x1xf32>
    %20 = arith.divf %18, %19 : vector<8x1xf32>
    %21 = arith.mulf %14, %14 : vector<8x64xf32>
    %cst_11 = arith.constant dense<0.000000e+00> : vector<8xf32>
    %22 = vector.multi_reduction <add>, %21, %cst_11 [1] : vector<8x64xf32> to vector<8xf32>
    %23 = vector.shape_cast %22 : vector<8xf32> to vector<8x1xf32>
    %cst_12 = arith.constant 6.400000e+01 : f32
    %24 = vector.broadcast %cst_12 : f32 to vector<8x1xf32>
    %25 = arith.divf %23, %24 : vector<8x1xf32>
    %26 = arith.mulf %20, %20 : vector<8x1xf32>
    %27 = arith.subf %25, %26 : vector<8x1xf32>
    %cst_13 = arith.constant 0.000000e+00 : f32
    %28 = vector.broadcast %cst_13 : f32 to vector<8x1xf32>
    %29 = arith.maximumf %27, %28 : vector<8x1xf32>
    %30 = vector.broadcast %20 : vector<8x1xf32> to vector<8x64xf32>
    %31 = arith.subf %14, %30 : vector<8x64xf32>
    %cst_14 = arith.constant 9.99999974E-6 : f32
    %32 = vector.broadcast %cst_14 : f32 to vector<8x1xf32>
    %33 = arith.addf %29, %32 : vector<8x1xf32>
    %34 = math.rsqrt %33 : vector<8x1xf32>
    %35 = vector.broadcast %34 : vector<8x1xf32> to vector<8x64xf32>
    %36 = arith.mulf %31, %35 : vector<8x64xf32>
    %37 = vector.broadcast %15 : vector<1x64xf32> to vector<8x64xf32>
    %38 = arith.mulf %36, %37 : vector<8x64xf32>
    %39 = vector.broadcast %16 : vector<1x64xf32> to vector<8x64xf32>
    %40 = arith.addf %38, %39 : vector<8x64xf32>
    %cst_15 = arith.constant 0.000000e+00 : f32
    %41 = vector.broadcast %cst_15 : f32 to vector<8x64xf32>
    %42 = arith.maximumf %40, %41 : vector<8x64xf32>
    %c0_16 = arith.constant 0 : index
    %c0_17 = arith.constant 0 : index
    %43 = vector.load %arg6[%c0_16, %c0_17] : memref<64x128xf32, #tpu.memory_space<vmem>>, vector<64x128xf32>
    %cst_18 = arith.constant dense<0.000000e+00> : vector<8x128xf32>
    %44 = tpu.matmul %42, %43, %cst_18 {dimension_numbers = #tpu.dot_dimension_numbers<[1], [0], [0], [1], [0, 0, 1, 1], [], []>} : vector<8x64xf32>, vector<64x128xf32>, vector<8x128xf32> -> vector<8x128xf32>
    %c0_19 = arith.constant 0 : index
    %c0_20 = arith.constant 0 : index
    %45 = vector.load %arg7[%c0_19, %c0_20] : memref<1x128xf32, #tpu.memory_space<vmem>>, vector<1x128xf32>
    %46 = vector.broadcast %45 : vector<1x128xf32> to vector<8x128xf32>
    %47 = arith.addf %44, %46 : vector<8x128xf32>
    %c0_21 = arith.constant 0 : index
    %c0_22 = arith.constant 0 : index
    %48 = vector.load %arg8[%c0_21, %c0_22] : memref<1x128xf32, #tpu.memory_space<vmem>>, vector<1x128xf32>
    %c0_23 = arith.constant 0 : index
    %c0_24 = arith.constant 0 : index
    %49 = vector.load %arg9[%c0_23, %c0_24] : memref<1x128xf32, #tpu.memory_space<vmem>>, vector<1x128xf32>
    %cst_25 = arith.constant dense<0.000000e+00> : vector<8xf32>
    %50 = vector.multi_reduction <add>, %47, %cst_25 [1] : vector<8x128xf32> to vector<8xf32>
    %51 = vector.shape_cast %50 : vector<8xf32> to vector<8x1xf32>
    %cst_26 = arith.constant 1.280000e+02 : f32
    %52 = vector.broadcast %cst_26 : f32 to vector<8x1xf32>
    %53 = arith.divf %51, %52 : vector<8x1xf32>
    %54 = arith.mulf %47, %47 : vector<8x128xf32>
    %cst_27 = arith.constant dense<0.000000e+00> : vector<8xf32>
    %55 = vector.multi_reduction <add>, %54, %cst_27 [1] : vector<8x128xf32> to vector<8xf32>
    %56 = vector.shape_cast %55 : vector<8xf32> to vector<8x1xf32>
    %cst_28 = arith.constant 1.280000e+02 : f32
    %57 = vector.broadcast %cst_28 : f32 to vector<8x1xf32>
    %58 = arith.divf %56, %57 : vector<8x1xf32>
    %59 = arith.mulf %53, %53 : vector<8x1xf32>
    %60 = arith.subf %58, %59 : vector<8x1xf32>
    %cst_29 = arith.constant 0.000000e+00 : f32
    %61 = vector.broadcast %cst_29 : f32 to vector<8x1xf32>
    %62 = arith.maximumf %60, %61 : vector<8x1xf32>
    %63 = vector.broadcast %53 : vector<8x1xf32> to vector<8x128xf32>
    %64 = arith.subf %47, %63 : vector<8x128xf32>
    %cst_30 = arith.constant 9.99999974E-6 : f32
    %65 = vector.broadcast %cst_30 : f32 to vector<8x1xf32>
    %66 = arith.addf %62, %65 : vector<8x1xf32>
    %67 = math.rsqrt %66 : vector<8x1xf32>
    %68 = vector.broadcast %67 : vector<8x1xf32> to vector<8x128xf32>
    %69 = arith.mulf %64, %68 : vector<8x128xf32>
    %70 = vector.broadcast %48 : vector<1x128xf32> to vector<8x128xf32>
    %71 = arith.mulf %69, %70 : vector<8x128xf32>
    %72 = vector.broadcast %49 : vector<1x128xf32> to vector<8x128xf32>
    %73 = arith.addf %71, %72 : vector<8x128xf32>
    %cst_31 = arith.constant 0.000000e+00 : f32
    %74 = vector.broadcast %cst_31 : f32 to vector<8x128xf32>
    %75 = arith.maximumf %73, %74 : vector<8x128xf32>
    %c0_32 = arith.constant 0 : index
    %c0_33 = arith.constant 0 : index
    %76 = vector.load %arg10[%c0_32, %c0_33] : memref<128x640xf32, #tpu.memory_space<vmem>>, vector<128x640xf32>
    %cst_34 = arith.constant dense<0.000000e+00> : vector<8x640xf32>
    %77 = tpu.matmul %75, %76, %cst_34 {dimension_numbers = #tpu.dot_dimension_numbers<[1], [0], [0], [1], [0, 0, 1, 1], [], []>} : vector<8x128xf32>, vector<128x640xf32>, vector<8x640xf32> -> vector<8x640xf32>
    %c0_35 = arith.constant 0 : index
    %c0_36 = arith.constant 0 : index
    %78 = vector.load %arg11[%c0_35, %c0_36] : memref<1x640xf32, #tpu.memory_space<vmem>>, vector<1x640xf32>
    %79 = vector.broadcast %78 : vector<1x640xf32> to vector<8x640xf32>
    %80 = arith.addf %77, %79 : vector<8x640xf32>
    %81 = math.absf %80 : vector<8x640xf32>
    %cst_37 = arith.constant 1.000000e+00 : f32
    %82 = vector.broadcast %cst_37 : f32 to vector<8x640xf32>
    %83 = arith.subf %82, %80 : vector<8x640xf32>
    %84 = arith.addf %83, %81 : vector<8x640xf32>
    %cst_38 = arith.constant 1.000000e+00 : f32
    %85 = vector.broadcast %cst_38 : f32 to vector<8x640xf32>
    %86 = arith.divf %85, %84 : vector<8x640xf32>
    %87 = arith.addf %86, %80 : vector<8x640xf32>
    %88 = arith.addf %87, %81 : vector<8x640xf32>
    %c0_39 = arith.constant 0 : index
    %c0_40 = arith.constant 0 : index
    %89 = vector.load %arg12[%c0_39, %c0_40] : memref<8x640xf32, #tpu.memory_space<vmem>>, vector<8x640xf32>
    tpu.vector_store %arg12[%c0_39, %c0_40], %88 {strides = array<i32>} : memref<8x640xf32, #tpu.memory_space<vmem>>, vector<8x640xf32>,
    return
  }
  func.func @transform_0(%arg0: i32) -> (i32, i32) {
    %c0_i32 = arith.constant 0 : i32
    %c0_i32_0 = arith.constant 0 : i32
    return %arg0, %c0_i32 : i32, i32
  }
  func.func @transform_1(%arg0: i32) -> (i32, i32) {
    %c0_i32 = arith.constant 0 : i32
    %c0_i32_0 = arith.constant 0 : i32
    %c0_i32_1 = arith.constant 0 : i32
    return %c0_i32, %c0_i32_0 : i32, i32
  }
  func.func @transform_2(%arg0: i32) -> (i32, i32) {
    %c0_i32 = arith.constant 0 : i32
    %c0_i32_0 = arith.constant 0 : i32
    %c0_i32_1 = arith.constant 0 : i32
    return %c0_i32, %c0_i32_0 : i32, i32
  }
  func.func @transform_3(%arg0: i32) -> (i32, i32) {
    %c0_i32 = arith.constant 0 : i32
    %c0_i32_0 = arith.constant 0 : i32
    %c0_i32_1 = arith.constant 0 : i32
    return %c0_i32, %c0_i32_0 : i32, i32
  }
  func.func @transform_4(%arg0: i32) -> (i32, i32) {
    %c0_i32 = arith.constant 0 : i32
    %c0_i32_0 = arith.constant 0 : i32
    %c0_i32_1 = arith.constant 0 : i32
    return %c0_i32, %c0_i32_0 : i32, i32
  }
  func.func @transform_5(%arg0: i32) -> (i32, i32) {
    %c0_i32 = arith.constant 0 : i32
    %c0_i32_0 = arith.constant 0 : i32
    %c0_i32_1 = arith.constant 0 : i32
    return %c0_i32, %c0_i32_0 : i32, i32
  }
  func.func @transform_6(%arg0: i32) -> (i32, i32) {
    %c0_i32 = arith.constant 0 : i32
    %c0_i32_0 = arith.constant 0 : i32
    %c0_i32_1 = arith.constant 0 : i32
    return %c0_i32, %c0_i32_0 : i32, i32
  }
  func.func @transform_7(%arg0: i32) -> (i32, i32) {
    %c0_i32 = arith.constant 0 : i32
    %c0_i32_0 = arith.constant 0 : i32
    %c0_i32_1 = arith.constant 0 : i32
    return %c0_i32, %c0_i32_0 : i32, i32
  }
  func.func @transform_8(%arg0: i32) -> (i32, i32) {
    %c0_i32 = arith.constant 0 : i32
    %c0_i32_0 = arith.constant 0 : i32
    %c0_i32_1 = arith.constant 0 : i32
    return %c0_i32, %c0_i32_0 : i32, i32
  }
  func.func @transform_9(%arg0: i32) -> (i32, i32) {
    %c0_i32 = arith.constant 0 : i32
    %c0_i32_0 = arith.constant 0 : i32
    %c0_i32_1 = arith.constant 0 : i32
    return %c0_i32, %c0_i32_0 : i32, i32
  }
  func.func @transform_10(%arg0: i32) -> (i32, i32) {
    %c0_i32 = arith.constant 0 : i32
    %c0_i32_0 = arith.constant 0 : i32
    %c0_i32_1 = arith.constant 0 : i32
    return %c0_i32, %c0_i32_0 : i32, i32
  }
  func.func @transform_11(%arg0: i32) -> (i32, i32) {
    %c0_i32 = arith.constant 0 : i32
    %c0_i32_0 = arith.constant 0 : i32
    return %arg0, %c0_i32 : i32, i32
  }
}

</mosaic_0001>

<llo_original>
// kernel: tpu_custom_call.1
$region0: #{tpu_custom_call.1}
  #allocation0 [shape = 'u32[]', space=smem, size = 0x4, offset = 0x4, fixed_abs, tag = 'smem constant byte address 0x4 - core index']
  #allocation1 [shape = 'u32[144,128]{1,0:T(1,128)}', space=vmem, size = 0x12000, scoped, tag = 'internal scratch']
  %s0 = inlined_call_operand.vmem [shape: f32[8,2], index: 0, kind: input, shape index: {}]
  %s1 = inlined_call_operand.vmem [shape: f32[2,64], index: 1, kind: input, shape index: {}]
  %s2 = inlined_call_operand.vmem [shape: f32[1,64], index: 2, kind: input, shape index: {}]
  %s3 = inlined_call_operand.vmem [shape: f32[1,64], index: 3, kind: input, shape index: {}]
  %s4 = inlined_call_operand.vmem [shape: f32[1,64], index: 4, kind: input, shape index: {}]
  %s5 = inlined_call_operand.hbm [shape: f32[64,128], index: 5, kind: input, shape index: {}]
  %s6 = inlined_call_operand.vmem [shape: f32[1,128], index: 6, kind: input, shape index: {}]
  %s7 = inlined_call_operand.vmem [shape: f32[1,128], index: 7, kind: input, shape index: {}]
  %s8 = inlined_call_operand.vmem [shape: f32[1,128], index: 8, kind: input, shape index: {}]
  %s9 = inlined_call_operand.hbm [shape: f32[128,640], index: 9, kind: input, shape index: {}]
  %s10 = inlined_call_operand.vmem [shape: f32[1,640], index: 10, kind: input, shape index: {}]
  %s11 = inlined_call_operand.hbm [shape: f32[8,640], index: 11, kind: output, shape index: {}]
  %s12 = sld [smem:[#allocation0]]
  $region62: #{tpu_custom_call.1} parent=0
    _
  %s14 = ssub.s32 1, %s12
  %s15 = scalar_select 0, %s14, %s12
  $region1: #{tpu_custom_call.1} parent=0
    #allocation2 [shape = 'u8[32768]{0}', space=vmem, size = 0x8000, scoped, tag = 'input window, operand 5, single buffered']
    #allocation3 [shape = 's32[1]{0}', space=sflag, size = 0x4, scoped, tag = 'scoped memory for tpu_custom_call.1']
    #allocation4 [shape = 's32[1]{0}', space=sflag, size = 0x4, scoped, tag = 'scoped memory for tpu_custom_call.1']
    #allocation5 [shape = 'u8[327680]{0}', space=vmem, size = 0x50000, scoped, tag = 'input window, operand 9, single buffered']
    #allocation6 [shape = 's32[1]{0}', space=sflag, size = 0x4, scoped, tag = 'scoped memory for tpu_custom_call.1']
    #allocation7 [shape = 'u8[20480]{0}', space=vmem, size = 0x5000, scoped, tag = 'output window, operand 0, single buffered']
    %16 = vsyncpa [#allocation3], 0
    %17 = vsyncpa [#allocation6], 0
    %18 = vsyncpa [#allocation4], 0
    // Predicated region
    $region2: #{tpu_custom_call.1} parent=1 // pred_check
      _
    $region3: #{tpu_custom_call.1} parent=1 // pred_check_branch
      %20 = sbr.rel (0) target = $region5
    $region4: #{tpu_custom_call.1} parent=1 // pred_region
      _
    $region5: #{tpu_custom_call.1} parent=1 // pred_fallthru
      _
    // Predicated region
    $region6: #{tpu_custom_call.1} parent=1 // pred_check
      _
    $region7: #{tpu_custom_call.1} parent=1 // pred_check_branch
      %22 = sbr.rel (0) target = $region9
    $region8: #{tpu_custom_call.1} parent=1 // pred_region
      _
    $region9: #{tpu_custom_call.1} parent=1 // pred_fallthru
      _
    // Predicated region
    $region10: #{tpu_custom_call.1} parent=1 // pred_check
      _
    $region11: #{tpu_custom_call.1} parent=1 // pred_check_branch
      %24 = sbr.rel (0) target = $region13
    $region12: #{tpu_custom_call.1} parent=1 // pred_region
      _
    $region13: #{tpu_custom_call.1} parent=1 // pred_fallthru
      _
    // Predicated region
    $region14: #{tpu_custom_call.1} parent=1 // pred_check
      _
    $region15: #{tpu_custom_call.1} parent=1 // pred_check_branch
      %26 = sbr.rel (0) target = $region17
    $region16: #{tpu_custom_call.1} parent=1 // pred_region
      _
    $region17: #{tpu_custom_call.1} parent=1 // pred_fallthru
      _
    // Predicated region
    $region18: #{tpu_custom_call.1} parent=1 // pred_check
      _
    $region19: #{tpu_custom_call.1} parent=1 // pred_check_branch
      %28 = sbr.rel (0) target = $region21
    $region20: #{tpu_custom_call.1} parent=1 // pred_region
      _
    $region21: #{tpu_custom_call.1} parent=1 // pred_fallthru
      _
    // Predicated region
    $region22: #{tpu_custom_call.1} parent=1 // pred_check
      _
    $region23: #{tpu_custom_call.1} parent=1 // pred_check_branch
      %30 = sbr.rel (0) target = $region25
    $region24: #{tpu_custom_call.1} parent=1 // pred_region
      %s32 = ssub.s32 1024, 1024
      %33 = vsyncadd [#allocation3], %s32
      %s34 = sshll.u32 [#allocation2], 4
      %s35 = int_to_ptr.vmem [resolvable:$true] %s34
      %40 = dma.hbm_to_vmem [thread:$0]  %s5, 1024, %s35, [#allocation3], 128, 128, 8
    $region25: #{tpu_custom_call.1} parent=1 // pred_fallthru
      _
    // Predicated region
    $region26: #{tpu_custom_call.1} parent=1 // pred_check
      _
    $region27: #{tpu_custom_call.1} parent=1 // pred_check_branch
      %42 = sbr.rel (0) target = $region29
    $region28: #{tpu_custom_call.1} parent=1 // pred_region
      _
    $region29: #{tpu_custom_call.1} parent=1 // pred_fallthru
      _
    // Predicated region
    $region30: #{tpu_custom_call.1} parent=1 // pred_check
      _
    $region31: #{tpu_custom_call.1} parent=1 // pred_check_branch
      %44 = sbr.rel (0) target = $region33
    $region32: #{tpu_custom_call.1} parent=1 // pred_region
      _
    $region33: #{tpu_custom_call.1} parent=1 // pred_fallthru
      _
    // Predicated region
    $region34: #{tpu_custom_call.1} parent=1 // pred_check
      _
    $region35: #{tpu_custom_call.1} parent=1 // pred_check_branch
      %46 = sbr.rel (0) target = $region37
    $region36: #{tpu_custom_call.1} parent=1 // pred_region
      _
    $region37: #{tpu_custom_call.1} parent=1 // pred_fallthru
      _
    // Predicated region
    $region38: #{tpu_custom_call.1} parent=1 // pred_check
      _
    $region39: #{tpu_custom_call.1} parent=1 // pred_check_branch
      %48 = sbr.rel (0) target = $region41
    $region40: #{tpu_custom_call.1} parent=1 // pred_region
      %s50 = ssub.s32 10240, 10240
      %51 = vsyncadd [#allocation6], %s50
      %s52 = sshll.u32 [#allocation5], 4
      %s53 = int_to_ptr.vmem [resolvable:$true] %s52
      %58 = dma.hbm_to_vmem [thread:$0]  %s9, 10240, %s53, [#allocation6], 640, 640, 40
    $region41: #{tpu_custom_call.1} parent=1 // pred_fallthru
      _
    // Predicated region
    $region42: #{tpu_custom_call.1} parent=1 // pred_check
      _
    $region43: #{tpu_custom_call.1} parent=1 // pred_check_branch
      %60 = sbr.rel (0) target = $region45
    $region44: #{tpu_custom_call.1} parent=1 // pred_region
      _
    $region45: #{tpu_custom_call.1} parent=1 // pred_fallthru
      _
    // Predicated region
    $region46: #{tpu_custom_call.1} parent=1 // pred_check
      _
    $region47: #{tpu_custom_call.1} parent=1 // pred_check_branch
      %62 = sbr.rel (0) target = $region49
    $region48: #{tpu_custom_call.1} parent=1 // pred_region
      %63 = dma.done [#allocation3], 1024
    $region49: #{tpu_custom_call.1} parent=1 // pred_fallthru
      _
    // Predicated region
    $region50: #{tpu_custom_call.1} parent=1 // pred_check
      _
    $region51: #{tpu_custom_call.1} parent=1 // pred_check_branch
      %65 = sbr.rel (0) target = $region53
    $region52: #{tpu_custom_call.1} parent=1 // pred_region
      %66 = dma.done [#allocation6], 10240
    $region53: #{tpu_custom_call.1} parent=1 // pred_fallthru
      _
    %v67 = vld [vmem:[%s0] sm:$0xff]
    %v68 = vld [vmem:[%s1] sm:$0x1]
    %70 = vset.pattern.permute.xlu0 0
    %71 = vperm.xlu0 %70, %v67
    %v72 = vpop.permute.xlu0 %71
    %v74 = vlaneseq
    %v75 = vshrl.u32 %v74, 7
    %v76 = vsub.s32 0, %v75
    %v77 = vrot.slane %v68, %v76
    %v78 = vmul.f32 %v72, %v77
    %v79 = vld [vmem:[%s1 + $0x1] sm:$0x1]
    %80 = vset.pattern.permute.xlu0 1
    %81 = vperm.xlu0 %80, %v67
    %v82 = vpop.permute.xlu0 %81
    %v84 = vlaneseq
    %v85 = vshrl.u32 %v84, 7
    %v86 = vsub.s32 0, %v85
    %v87 = vrot.slane %v79, %v86
    %v88 = vmul.f32 %v82, %v87
    %v89 = vadd.f32 %v78, %v88
    %v90 = vld [vmem:[%s2] sm:$0x1]
    %v92 = vlaneseq
    %v93 = vshrl.u32 %v92, 7
    %v94 = vsub.s32 0, %v93
    %v95 = vrot.slane %v90, %v94
    %v97 = vadd.f32 %v89, %v95
    %v98 = vld [vmem:[%s3] sm:$0x1]
    %v99 = vld [vmem:[%s4] sm:$0x1]
    %vm100 = vcmask 523264
    %v101 = vsel %vm100, %v97, 0.0
    %102 = vadd.xlane.f32.xlu0 %v101
    %v103 = vpop.xlane.xlu0 %102
    %v104 = vrcp.pop 64.0
    %v105 = vmul.f32 %v103, %v104
    %v106 = vmul.f32 %v97, %v97
    %v107 = vsel %vm100, %v106, 0.0
    %108 = vadd.xlane.f32.xlu0 %v107
    %v109 = vpop.xlane.xlu0 %108
    %v110 = vmul.f32 %v109, %v104
    %v111 = vmul.f32 %v105, %v105
    %v112 = vsub.f32 %v110, %v111
    %v113 = vmax.f32 %v112, 0.0
    %v114 = vsub.f32 %v97, %v105
    %v115 = vadd.f32 %v113, 1e-05
    %v116 = vrsqrt.pop %v115
    %v117 = vmul.f32 %v114, %v116
    %v119 = vlaneseq
    %v120 = vshrl.u32 %v119, 7
    %v121 = vsub.s32 0, %v120
    %v122 = vrot.slane %v98, %v121
    %v124 = vmul.f32 %v117, %v122
    %v126 = vlaneseq
    %v127 = vshrl.u32 %v126, 7
    %v128 = vsub.s32 0, %v127
    %v129 = vrot.slane %v99, %v128
    %v131 = vadd.f32 %v124, %v129
    %v132 = vmax.f32 %v131, 0.0
    %v133 = vld [vmem:[#allocation2] sm:$0xff]
    %v134 = vld [vmem:[#allocation2 + $0x8] sm:$0xff]
    %v135 = vld [vmem:[#allocation2 + $0x10] sm:$0xff]
    %v136 = vld [vmem:[#allocation2 + $0x18] sm:$0xff]
    %v137 = vld [vmem:[#allocation2 + $0x20] sm:$0xff]
    %v138 = vld [vmem:[#allocation2 + $0x28] sm:$0xff]
    %v139 = vld [vmem:[#allocation2 + $0x30] sm:$0xff]
    %v140 = vld [vmem:[#allocation2 + $0x38] sm:$0xff]
    %v141 = vld [vmem:[%s6] sm:$0x1]
    %v143 = vlaneseq
    %v144 = vshrl.u32 %v143, 7
    %v145 = vsub.s32 0, %v144
    %v146 = vrot.slane %v141, %v145
    %v149 = vsel %vm100, %v132, 0
    %151 = vmatprep.subr.mxu0 0.0
    %152 = vmatpush1.msra.mxu0 %v133
    %153 = vmatprep.subr.mxu0 0.0
    %154 = vmatpush1.msra.mxu0 %v134
    %155 = vmatprep.subr.mxu0 0.0
    %156 = vmatpush1.msra.mxu0 %v135
    %157 = vmatprep.subr.mxu0 0.0
    %158 = vmatpush1.msra.mxu0 %v136
    %159 = vmatprep.subr.mxu0 0.0
    %160 = vmatpush1.msra.mxu0 %v137
    %161 = vmatprep.subr.mxu0 0.0
    %162 = vmatpush1.msra.mxu0 %v138
    %163 = vmatprep.subr.mxu0 0.0
    %164 = vmatpush1.msra.mxu0 %v139
    %165 = vmatprep.subr.mxu0 0.0
    %166 = vmatpush1.msra.mxu0 %v140
    %167 = vmatprep.subr.mxu0 0.0
    %168 = vmatpush1.msra.mxu0 0.0
    %169 = vmatprep.subr.mxu0 0.0
    %170 = vmatpush1.msra.mxu0 0.0
    %171 = vmatprep.subr.mxu0 0.0
    %172 = vmatpush1.msra.mxu0 0.0
    %173 = vmatprep.subr.mxu0 0.0
    %174 = vmatpush1.msra.mxu0 0.0
    %175 = vmatprep.subr.mxu0 0.0
    %176 = vmatpush1.msra.mxu0 0.0
    %177 = vmatprep.subr.mxu0 0.0
    %178 = vmatpush1.msra.mxu0 0.0
    %179 = vmatprep.subr.mxu0 0.0
    %180 = vmatpush1.msra.mxu0 0.0
    %181 = vmatprep.subr.mxu0 0.0
    %182 = vmatpush1.msra.mxu0 0.0
    %183 = vmatprep.subr.mxu0 0.0
    %184 = vmatpush1.msra.mxu0 0.0
    %185 = vmatprep.subr.mxu0 0.0
    %186 = vmatpush1.msra.mxu0 0.0
    %187 = vmatprep.subr.mxu0 0.0
    %188 = vmatpush1.msra.mxu0 0.0
    %189 = vmatprep.subr.mxu0 0.0
    %190 = vmatpush1.msra.mxu0 0.0
    %191 = vmatprep.subr.mxu0 0.0
    %192 = vmatpush1.msra.mxu0 0.0
    %193 = vmatprep.subr.mxu0 0.0
    %194 = vmatpush1.msra.mxu0 0.0
    %195 = vmatprep.subr.mxu0 0.0
    %196 = vmatpush1.msra.mxu0 0.0
    %197 = vmatprep.subr.mxu0 0.0
    %198 = vmatpush1.msra.mxu0 0.0
    %199 = vmatprep.subr.mxu0 0.0
    %200 = vmatpush1.msra.mxu0 0.0
    %201 = vmatprep.subr.mxu0 0.0
    %202 = vmatpush1.msra.mxu0 0.0
    %203 = vmatprep.subr.mxu0 0.0
    %204 = vmatpush1.msra.mxu0 0.0
    %205 = vmatprep.subr.mxu0 0.0
    %206 = vmatpush1.msra.mxu0 0.0
    %207 = vmatprep.subr.mxu0 0.0
    %208 = vmatpush1.msra.mxu0 0.0
    %209 = vmatprep.subr.mxu0 0.0
    %210 = vmatpush1.msra.mxu0 0.0
    %211 = vmatprep.subr.mxu0 0.0
    %212 = vmatpush1.msra.mxu0 0.0
    %213 = vmatprep.subr.mxu0 0.0
    %214 = vmatpush1.msra.mxu0 0.0
    %215 = vmatprep.mubr.f32.mxu0 0.0
    %216 = vmatmul.mubr.f32.gmra.mrb[0].mxu0 %v149
    %v217 = vpop.f32.mrb[0].mxu0
    %v218 = vadd.f32 %v146, %v217
    %v219 = vpop.f32.mrb[0].mxu0
    %220 = vdwg.mxu0
    %v221 = vld [vmem:[%s7] sm:$0x1]
    %v222 = vld [vmem:[%s8] sm:$0x1]
    %223 = vadd.xlane.f32.xlu0 %v218
    %v224 = vpop.xlane.xlu0 %223
    %v225 = vrcp.pop 128.0
    %v226 = vmul.f32 %v224, %v225
    %v227 = vmul.f32 %v218, %v218
    %228 = vadd.xlane.f32.xlu0 %v227
    %v229 = vpop.xlane.xlu0 %228
    %v230 = vmul.f32 %v229, %v225
    %v231 = vmul.f32 %v226, %v226
    %v232 = vsub.f32 %v230, %v231
    %v233 = vmax.f32 %v232, 0.0
    %v234 = vsub.f32 %v218, %v226
    %v235 = vadd.f32 %v233, 1e-05
    %v236 = vrsqrt.pop %v235
    %v237 = vmul.f32 %v234, %v236
    %v239 = vlaneseq
    %v240 = vshrl.u32 %v239, 7
    %v241 = vsub.s32 0, %v240
    %v242 = vrot.slane %v221, %v241
    %v244 = vmul.f32 %v237, %v242
    %v246 = vlaneseq
    %v247 = vshrl.u32 %v246, 7
    %v248 = vsub.s32 0, %v247
    %v249 = vrot.slane %v222, %v248
    %v251 = vadd.f32 %v244, %v249
    %v252 = vmax.f32 %v251, 0.0
    %v253 = vld [vmem:[#allocation5] sm:$0xff]
    %v254 = vld [vmem:[#allocation5 + $0x8] sm:$0xff]
    %v255 = vld [vmem:[#allocation5 + $0x10] sm:$0xff]
    %v256 = vld [vmem:[#allocation5 + $0x18] sm:$0xff]
    %v257 = vld [vmem:[#allocation5 + $0x20] sm:$0xff]
    %v258 = vld [vmem:[#allocation5 + $0x28] sm:$0xff]
    %v259 = vld [vmem:[#allocation5 + $0x30] sm:$0xff]
    %v260 = vld [vmem:[#allocation5 + $0x38] sm:$0xff]
    %v261 = vld [vmem:[#allocation5 + $0x40] sm:$0xff]
    %v262 = vld [vmem:[#allocation5 + $0x48] sm:$0xff]
    %v263 = vld [vmem:[#allocation5 + $0x50] sm:$0xff]
    %v264 = vld [vmem:[#allocation5 + $0x58] sm:$0xff]
    %v265 = vld [vmem:[#allocation5 + $0x60] sm:$0xff]
    %v266 = vld [vmem:[#allocation5 + $0x68] sm:$0xff]
    %v267 = vld [vmem:[#allocation5 + $0x70] sm:$0xff]
    %v268 = vld [vmem:[#allocation5 + $0x78] sm:$0xff]
    %v269 = vld [vmem:[#allocation5 + $0x80] sm:$0xff]
    %v270 = vld [vmem:[#allocation5 + $0x88] sm:$0xff]
    %v271 = vld [vmem:[#allocation5 + $0x90] sm:$0xff]
    %v272 = vld [vmem:[#allocation5 + $0x98] sm:$0xff]
    %v273 = vld [vmem:[#allocation5 + $0xa0] sm:$0xff]
    %v274 = vld [vmem:[#allocation5 + $0xa8] sm:$0xff]
    %v275 = vld [vmem:[#allocation5 + $0xb0] sm:$0xff]
    %v276 = vld [vmem:[#allocation5 + $0xb8] sm:$0xff]
    %v277 = vld [vmem:[#allocation5 + $0xc0] sm:$0xff]
    %v278 = vld [vmem:[#allocation5 + $0xc8] sm:$0xff]
    %v279 = vld [vmem:[#allocation5 + $0xd0] sm:$0xff]
    %v280 = vld [vmem:[#allocation5 + $0xd8] sm:$0xff]
    %v281 = vld [vmem:[#allocation5 + $0xe0] sm:$0xff]
    %v282 = vld [vmem:[#allocation5 + $0xe8] sm:$0xff]
    %v283 = vld [vmem:[#allocation5 + $0xf0] sm:$0xff]
    %v284 = vld [vmem:[#allocation5 + $0xf8] sm:$0xff]
    %v285 = vld [vmem:[#allocation5 + $0x100] sm:$0xff]
    %v286 = vld [vmem:[#allocation5 + $0x108] sm:$0xff]
    %v287 = vld [vmem:[#allocation5 + $0x110] sm:$0xff]
    %v288 = vld [vmem:[#allocation5 + $0x118] sm:$0xff]
    %v289 = vld [vmem:[#allocation5 + $0x120] sm:$0xff]
    %v290 = vld [vmem:[#allocation5 + $0x128] sm:$0xff]
    %v291 = vld [vmem:[#allocation5 + $0x130] sm:$0xff]
    %v292 = vld [vmem:[#allocation5 + $0x138] sm:$0xff]
    %v293 = vld [vmem:[#allocation5 + $0x140] sm:$0xff]
    %v294 = vld [vmem:[#allocation5 + $0x148] sm:$0xff]
    %v295 = vld [vmem:[#allocation5 + $0x150] sm:$0xff]
    %v296 = vld [vmem:[#allocation5 + $0x158] sm:$0xff]
    %v297 = vld [vmem:[#allocation5 + $0x160] sm:$0xff]
    %v298 = vld [vmem:[#allocation5 + $0x168] sm:$0xff]
    %v299 = vld [vmem:[#allocation5 + $0x170] sm:$0xff]
    %v300 = vld [vmem:[#allocation5 + $0x178] sm:$0xff]
    %v301 = vld [vmem:[#allocation5 + $0x180] sm:$0xff]
    %v302 = vld [vmem:[#allocation5 + $0x188] sm:$0xff]
    %v303 = vld [vmem:[#allocation5 + $0x190] sm:$0xff]
    %v304 = vld [vmem:[#allocation5 + $0x198] sm:$0xff]
    %v305 = vld [vmem:[#allocation5 + $0x1a0] sm:$0xff]
    %v306 = vld [vmem:[#allocation5 + $0x1a8] sm:$0xff]
    %v307 = vld [vmem:[#allocation5 + $0x1b0] sm:$0xff]
    %v308 = vld [vmem:[#allocation5 + $0x1b8] sm:$0xff]
    %v309 = vld [vmem:[#allocation5 + $0x1c0] sm:$0xff]
    %v310 = vld [vmem:[#allocation5 + $0x1c8] sm:$0xff]
    %v311 = vld [vmem:[#allocation5 + $0x1d0] sm:$0xff]
    %v312 = vld [vmem:[#allocation5 + $0x1d8] sm:$0xff]
    %v313 = vld [vmem:[#allocation5 + $0x1e0] sm:$0xff]
    %v314 = vld [vmem:[#allocation5 + $0x1e8] sm:$0xff]
    %v315 = vld [vmem:[#allocation5 + $0x1f0] sm:$0xff]
    %v316 = vld [vmem:[#allocation5 + $0x1f8] sm:$0xff]
    %v317 = vld [vmem:[#allocation5 + $0x200] sm:$0xff]
    %v318 = vld [vmem:[#allocation5 + $0x208] sm:$0xff]
    %v319 = vld [vmem:[#allocation5 + $0x210] sm:$0xff]
    %v320 = vld [vmem:[#allocation5 + $0x218] sm:$0xff]
    %v321 = vld [vmem:[#allocation5 + $0x220] sm:$0xff]
    %v322 = vld [vmem:[#allocation5 + $0x228] sm:$0xff]
    %v323 = vld [vmem:[#allocation5 + $0x230] sm:$0xff]
    %v324 = vld [vmem:[#allocation5 + $0x238] sm:$0xff]
    %v325 = vld [vmem:[#allocation5 + $0x240] sm:$0xff]
    %v326 = vld [vmem:[#allocation5 + $0x248] sm:$0xff]
    %v327 = vld [vmem:[#allocation5 + $0x250] sm:$0xff]
    %v328 = vld [vmem:[#allocation5 + $0x258] sm:$0xff]
    %v329 = vld [vmem:[#allocation5 + $0x260] sm:$0xff]
    %v330 = vld [vmem:[#allocation5 + $0x268] sm:$0xff]
    %v331 = vld [vmem:[#allocation5 + $0x270] sm:$0xff]
    %v332 = vld [vmem:[#allocation5 + $0x278] sm:$0xff]
    %v333 = vld [vmem:[%s10] sm:$0x1f]
    %v335 = vlaneseq
    %v336 = vshrl.u32 %v335, 7
    %v337 = vsub.s32 0, %v336
    %v338 = vrot.slane %v333, %v337
    %v339 = vlaneseq
    %v340 = vshrl.u32 %v339, 7
    %v341 = vsub.s32 1, %v340
    %v342 = vrot.slane %v333, %v341
    %v343 = vlaneseq
    %v344 = vshrl.u32 %v343, 7
    %v345 = vsub.s32 2, %v344
    %v346 = vrot.slane %v333, %v345
    %v347 = vlaneseq
    %v348 = vshrl.u32 %v347, 7
    %v349 = vsub.s32 3, %v348
    %v350 = vrot.slane %v333, %v349
    %v351 = vlaneseq
    %v352 = vshrl.u32 %v351, 7
    %v353 = vsub.s32 4, %v352
    %v354 = vrot.slane %v333, %v353
    %360 = vmatprep.subr.mxu0 %v254
    %361 = vmatpush1.msra.mxu0 %v253
    %362 = vmatprep.subr.mxu0 %v259
    %363 = vmatpush1.msra.mxu0 %v258
    %364 = vmatprep.subr.mxu0 %v264
    %365 = vmatpush1.msra.mxu0 %v263
    %366 = vmatprep.subr.mxu0 %v269
    %367 = vmatpush1.msra.mxu0 %v268
    %368 = vmatprep.subr.mxu0 %v274
    %369 = vmatpush1.msra.mxu0 %v273
    %370 = vmatprep.subr.mxu0 %v279
    %371 = vmatpush1.msra.mxu0 %v278
    %372 = vmatprep.subr.mxu0 %v284
    %373 = vmatpush1.msra.mxu0 %v283
    %374 = vmatprep.subr.mxu0 %v289
    %375 = vmatpush1.msra.mxu0 %v288
    %376 = vmatprep.subr.mxu0 %v294
    %377 = vmatpush1.msra.mxu0 %v293
    %378 = vmatprep.subr.mxu0 %v299
    %379 = vmatpush1.msra.mxu0 %v298
    %380 = vmatprep.subr.mxu0 %v304
    %381 = vmatpush1.msra.mxu0 %v303
    %382 = vmatprep.subr.mxu0 %v309
    %383 = vmatpush1.msra.mxu0 %v308
    %384 = vmatprep.subr.mxu0 %v314
    %385 = vmatpush1.msra.mxu0 %v313
    %386 = vmatprep.subr.mxu0 %v319
    %387 = vmatpush1.msra.mxu0 %v318
    %388 = vmatprep.subr.mxu0 %v324
    %389 = vmatpush1.msra.mxu0 %v323
    %390 = vmatprep.subr.mxu0 %v329
    %391 = vmatpush1.msra.mxu0 %v328
    %392 = vmatprep.subr.mxu0 0.0
    %393 = vmatpush1.msra.mxu0 0.0
    %394 = vmatprep.subr.mxu0 0.0
    %395 = vmatpush1.msra.mxu0 0.0
    %396 = vmatprep.subr.mxu0 0.0
    %397 = vmatpush1.msra.mxu0 0.0
    %398 = vmatprep.subr.mxu0 0.0
    %399 = vmatpush1.msra.mxu0 0.0
    %400 = vmatprep.subr.mxu0 0.0
    %401 = vmatpush1.msra.mxu0 0.0
    %402 = vmatprep.subr.mxu0 0.0
    %403 = vmatpush1.msra.mxu0 0.0
    %404 = vmatprep.subr.mxu0 0.0
    %405 = vmatpush1.msra.mxu0 0.0
    %406 = vmatprep.subr.mxu0 0.0
    %407 = vmatpush1.msra.mxu0 0.0
    %408 = vmatprep.subr.mxu0 0.0
    %409 = vmatpush1.msra.mxu0 0.0
    %410 = vmatprep.subr.mxu0 0.0
    %411 = vmatpush1.msra.mxu0 0.0
    %412 = vmatprep.subr.mxu0 0.0
    %413 = vmatpush1.msra.mxu0 0.0
    %414 = vmatprep.subr.mxu0 0.0
    %415 = vmatpush1.msra.mxu0 0.0
    %416 = vmatprep.subr.mxu0 0.0
    %417 = vmatpush1.msra.mxu0 0.0
    %418 = vmatprep.subr.mxu0 0.0
    %419 = vmatpush1.msra.mxu0 0.0
    %420 = vmatprep.subr.mxu0 0.0
    %421 = vmatpush1.msra.mxu0 0.0
    %422 = vmatprep.subr.mxu0 0.0
    %423 = vmatpush1.msra.mxu0 0.0
    %424 = vmatprep.mubr.f32.mxu0 0.0
    %425 = vmatmul.mubr.f32.gmra.mrb[0].mxu0 %v252
    %v426 = vpop.f32.mrb[0].mxu0
    %v427 = vadd.f32 %v338, %v426
    %v428 = vpop.f32.mrb[0].mxu0
    %v429 = vadd.f32 %v342, %v428
    %430 = vdwg.mxu0
    %431 = vmatprep.subr.mxu0 %v256
    %432 = vmatpush1.msra.mxu0 %v255
    %433 = vmatprep.subr.mxu0 %v261
    %434 = vmatpush1.msra.mxu0 %v260
    %435 = vmatprep.subr.mxu0 %v266
    %436 = vmatpush1.msra.mxu0 %v265
    %437 = vmatprep.subr.mxu0 %v271
    %438 = vmatpush1.msra.mxu0 %v270
    %439 = vmatprep.subr.mxu0 %v276
    %440 = vmatpush1.msra.mxu0 %v275
    %441 = vmatprep.subr.mxu0 %v281
    %442 = vmatpush1.msra.mxu0 %v280
    %443 = vmatprep.subr.mxu0 %v286
    %444 = vmatpush1.msra.mxu0 %v285
    %445 = vmatprep.subr.mxu0 %v291
    %446 = vmatpush1.msra.mxu0 %v290
    %447 = vmatprep.subr.mxu0 %v296
    %448 = vmatpush1.msra.mxu0 %v295
    %449 = vmatprep.subr.mxu0 %v301
    %450 = vmatpush1.msra.mxu0 %v300
    %451 = vmatprep.subr.mxu0 %v306
    %452 = vmatpush1.msra.mxu0 %v305
    %453 = vmatprep.subr.mxu0 %v311
    %454 = vmatpush1.msra.mxu0 %v310
    %455 = vmatprep.subr.mxu0 %v316
    %456 = vmatpush1.msra.mxu0 %v315
    %457 = vmatprep.subr.mxu0 %v321
    %458 = vmatpush1.msra.mxu0 %v320
    %459 = vmatprep.subr.mxu0 %v326
    %460 = vmatpush1.msra.mxu0 %v325
    %461 = vmatprep.subr.mxu0 %v331
    %462 = vmatpush1.msra.mxu0 %v330
    %463 = vmatprep.subr.mxu0 0.0
    %464 = vmatpush1.msra.mxu0 0.0
    %465 = vmatprep.subr.mxu0 0.0
    %466 = vmatpush1.msra.mxu0 0.0
    %467 = vmatprep.subr.mxu0 0.0
    %468 = vmatpush1.msra.mxu0 0.0
    %469 = vmatprep.subr.mxu0 0.0
    %470 = vmatpush1.msra.mxu0 0.0
    %471 = vmatprep.subr.mxu0 0.0
    %472 = vmatpush1.msra.mxu0 0.0
    %473 = vmatprep.subr.mxu0 0.0
    %474 = vmatpush1.msra.mxu0 0.0
    %475 = vmatprep.subr.mxu0 0.0
    %476 = vmatpush1.msra.mxu0 0.0
    %477 = vmatprep.subr.mxu0 0.0
    %478 = vmatpush1.msra.mxu0 0.0
    %479 = vmatprep.subr.mxu0 0.0
    %480 = vmatpush1.msra.mxu0 0.0
    %481 = vmatprep.subr.mxu0 0.0
    %482 = vmatpush1.msra.mxu0 0.0
    %483 = vmatprep.subr.mxu0 0.0
    %484 = vmatpush1.msra.mxu0 0.0
    %485 = vmatprep.subr.mxu0 0.0
    %486 = vmatpush1.msra.mxu0 0.0
    %487 = vmatprep.subr.mxu0 0.0
    %488 = vmatpush1.msra.mxu0 0.0
    %489 = vmatprep.subr.mxu0 0.0
    %490 = vmatpush1.msra.mxu0 0.0
    %491 = vmatprep.subr.mxu0 0.0
    %492 = vmatpush1.msra.mxu0 0.0
    %493 = vmatprep.subr.mxu0 0.0
    %494 = vmatpush1.msra.mxu0 0.0
    %495 = vmatprep.mubr.f32.mxu0 0.0
    %496 = vmatmul.mubr.f32.gmra.mrb[0].mxu0 %v252
    %v497 = vpop.f32.mrb[0].mxu0
    %v498 = vadd.f32 %v346, %v497
    %v499 = vpop.f32.mrb[0].mxu0
    %v500 = vadd.f32 %v350, %v499
    %501 = vdwg.mxu0
    %502 = vmatprep.subr.mxu0 0.0
    %503 = vmatpush1.msra.mxu0 %v257
    %504 = vmatprep.subr.mxu0 0.0
    %505 = vmatpush1.msra.mxu0 %v262
    %506 = vmatprep.subr.mxu0 0.0
    %507 = vmatpush1.msra.mxu0 %v267
    %508 = vmatprep.subr.mxu0 0.0
    %509 = vmatpush1.msra.mxu0 %v272
    %510 = vmatprep.subr.mxu0 0.0
    %511 = vmatpush1.msra.mxu0 %v277
    %512 = vmatprep.subr.mxu0 0.0
    %513 = vmatpush1.msra.mxu0 %v282
    %514 = vmatprep.subr.mxu0 0.0
    %515 = vmatpush1.msra.mxu0 %v287
    %516 = vmatprep.subr.mxu0 0.0
    %517 = vmatpush1.msra.mxu0 %v292
    %518 = vmatprep.subr.mxu0 0.0
    %519 = vmatpush1.msra.mxu0 %v297
    %520 = vmatprep.subr.mxu0 0.0
    %521 = vmatpush1.msra.mxu0 %v302
    %522 = vmatprep.subr.mxu0 0.0
    %523 = vmatpush1.msra.mxu0 %v307
    %524 = vmatprep.subr.mxu0 0.0
    %525 = vmatpush1.msra.mxu0 %v312
    %526 = vmatprep.subr.mxu0 0.0
    %527 = vmatpush1.msra.mxu0 %v317
    %528 = vmatprep.subr.mxu0 0.0
    %529 = vmatpush1.msra.mxu0 %v322
    %530 = vmatprep.subr.mxu0 0.0
    %531 = vmatpush1.msra.mxu0 %v327
    %532 = vmatprep.subr.mxu0 0.0
    %533 = vmatpush1.msra.mxu0 %v332
    %534 = vmatprep.subr.mxu0 0.0
    %535 = vmatpush1.msra.mxu0 0.0
    %536 = vmatprep.subr.mxu0 0.0
    %537 = vmatpush1.msra.mxu0 0.0
    %538 = vmatprep.subr.mxu0 0.0
    %539 = vmatpush1.msra.mxu0 0.0
    %540 = vmatprep.subr.mxu0 0.0
    %541 = vmatpush1.msra.mxu0 0.0
    %542 = vmatprep.subr.mxu0 0.0
    %543 = vmatpush1.msra.mxu0 0.0
    %544 = vmatprep.subr.mxu0 0.0
    %545 = vmatpush1.msra.mxu0 0.0
    %546 = vmatprep.subr.mxu0 0.0
    %547 = vmatpush1.msra.mxu0 0.0
    %548 = vmatprep.subr.mxu0 0.0
    %549 = vmatpush1.msra.mxu0 0.0
    %550 = vmatprep.subr.mxu0 0.0
    %551 = vmatpush1.msra.mxu0 0.0
    %552 = vmatprep.subr.mxu0 0.0
    %553 = vmatpush1.msra.mxu0 0.0
    %554 = vmatprep.subr.mxu0 0.0
    %555 = vmatpush1.msra.mxu0 0.0
    %556 = vmatprep.subr.mxu0 0.0
    %557 = vmatpush1.msra.mxu0 0.0
    %558 = vmatprep.subr.mxu0 0.0
    %559 = vmatpush1.msra.mxu0 0.0
    %560 = vmatprep.subr.mxu0 0.0
    %561 = vmatpush1.msra.mxu0 0.0
    %562 = vmatprep.subr.mxu0 0.0
    %563 = vmatpush1.msra.mxu0 0.0
    %564 = vmatprep.subr.mxu0 0.0
    %565 = vmatpush1.msra.mxu0 0.0
    %566 = vmatprep.mubr.f32.mxu0 0.0
    %567 = vmatmul.mubr.f32.gmra.mrb[0].mxu0 %v252
    %v568 = vpop.f32.mrb[0].mxu0
    %v569 = vadd.f32 %v354, %v568
    %v570 = vpop.f32.mrb[0].mxu0
    %571 = vdwg.mxu0
    %v572 = vand.u32 2147483647, %v427
    %v573 = vand.u32 2147483647, %v429
    %v574 = vand.u32 2147483647, %v498
    %v575 = vand.u32 2147483647, %v500
    %v576 = vand.u32 2147483647, %v569
    %v577 = vsub.f32 1.0, %v427
    %v578 = vsub.f32 1.0, %v429
    %v579 = vsub.f32 1.0, %v498
    %v580 = vsub.f32 1.0, %v500
    %v581 = vsub.f32 1.0, %v569
    %v582 = vadd.f32 %v577, %v572
    %v583 = vadd.f32 %v578, %v573
    %v584 = vadd.f32 %v579, %v574
    %v585 = vadd.f32 %v580, %v575
    %v586 = vadd.f32 %v581, %v576
    %v587 = vrcp.pop %v582
    %v588 = vmul.f32 1.0, %v587
    %v589 = vrcp.pop %v583
    %v590 = vmul.f32 1.0, %v589
    %v591 = vrcp.pop %v584
    %v592 = vmul.f32 1.0, %v591
    %v593 = vrcp.pop %v585
    %v594 = vmul.f32 1.0, %v593
    %v595 = vrcp.pop %v586
    %v596 = vmul.f32 1.0, %v595
    %v597 = vadd.f32 %v588, %v427
    %v598 = vadd.f32 %v590, %v429
    %v599 = vadd.f32 %v592, %v498
    %v600 = vadd.f32 %v594, %v500
    %v601 = vadd.f32 %v596, %v569
    %v602 = vadd.f32 %v597, %v572
    %v603 = vadd.f32 %v598, %v573
    %v604 = vadd.f32 %v599, %v574
    %v605 = vadd.f32 %v600, %v575
    %v606 = vadd.f32 %v601, %v576
    %607 = vst [vmem:[#allocation7] sm:$0xff] %v602
    %608 = vst [vmem:[#allocation7 + $0x8] sm:$0xff] %v603
    %609 = vst [vmem:[#allocation7 + $0x10] sm:$0xff] %v604
    %610 = vst [vmem:[#allocation7 + $0x18] sm:$0xff] %v605
    %611 = vst [vmem:[#allocation7 + $0x20] sm:$0xff] %v606
    // Predicated region
    $region54: #{tpu_custom_call.1} parent=1 // pred_check
      _
    $region55: #{tpu_custom_call.1} parent=1 // pred_check_branch
      %613 = sbr.rel (0) target = $region57
    $region56: #{tpu_custom_call.1} parent=1 // pred_region
      %s615 = ssub.s32 640, 640
      %616 = vsyncadd [#allocation4], %s615
      %s618 = sshll.u32 [#allocation7], 4
      %s619 = int_to_ptr.vmem [resolvable:$true] %s618
      %621 = dma.vmem_to_hbm [thread:$0]  %s619, 640, %s11, [#allocation4]
    $region57: #{tpu_custom_call.1} parent=1 // pred_fallthru
      _
    // Predicated region
    $region58: #{tpu_custom_call.1} parent=1 // pred_check
      _
    $region59: #{tpu_custom_call.1} parent=1 // pred_check_branch
      %623 = sbr.rel (0) target = $region61
    $region60: #{tpu_custom_call.1} parent=1 // pred_region
      %624 = dma.done [#allocation4], 640
    $region61: #{tpu_custom_call.1} parent=1 // pred_fallthru
      _
    %625 = vsyncpa [#allocation3], 1
    %626 = vsyncpa [#allocation6], 1
    %627 = vsyncpa [#allocation4], 1

</llo_original>
